<compile_context>
chip_gen: v7x
topology: tpu7x:2x2x1
jax: 0.10.0
libtpu: 0.0.40
codegen_flags: <defaults>
</compile_context>

<pallas_src>
import jax
import jax.numpy as jnp
from jax.experimental import pallas as pl
from jax.experimental.pallas import tpu as pltpu


def _make_odefunc_kernel(num_mid, use_tanh):
    """Fused MLP kernel with `num_mid` middle layers, statically unrolled.

    All operands are in the transposed (feature, batch) layout.
    """
    act = jnp.tanh if use_tanh else (lambda v: jnp.maximum(v, 0.0))

    def kernel(*refs):
        # refs layout: xT, w1, b1, (wm_i, bm_i) * num_mid, wf, bf, outT
        x_ref = refs[0]
        w1_ref, b1_ref = refs[1], refs[2]
        mid_refs = refs[3:3 + 2 * num_mid]
        wf_ref = refs[3 + 2 * num_mid]
        bf_ref = refs[4 + 2 * num_mid]
        out_ref = refs[5 + 2 * num_mid]

        # fc1: (H, D) @ (D, block_b) -> (H, block_b); bias (H,1) broadcasts
        # across the lane (batch) axis.
        h = jnp.dot(w1_ref[...], x_ref[...],
                    preferred_element_type=jnp.float32) + b1_ref[...]
        h = act(h)

        # middle layers (statically unrolled)
        for i in range(num_mid):
            wm_ref = mid_refs[2 * i]
            bm_ref = mid_refs[2 * i + 1]
            h = jnp.dot(wm_ref[...], h,
                        preferred_element_type=jnp.float32) + bm_ref[...]
            h = act(h)

        # fc_final (no activation): (D, H) @ (H, block_b) -> (D, block_b)
        out = jnp.dot(wf_ref[...], h,
                      preferred_element_type=jnp.float32) + bf_ref[...]
        out_ref[...] = out.astype(out_ref.dtype)

    return kernel


def ode_func_forward(t, x, w1, b1, mid_params, wf, bf, use_tanh=False):
    """Pallas implementation of ODEFunc.forward(t, x).

    x:   (B, latent_dim)
    w1:  (nhidden, latent_dim), b1: (nhidden,)        [PyTorch (out, in) layout]
    mid_params: list of (wm (nhidden, nhidden), bm (nhidden,))
    wf:  (latent_dim, nhidden), bf: (latent_dim,)
    Returns (B, latent_dim).
    """
    del t  # unused, matches PyTorch forward signature
    B, D = x.shape
    H = w1.shape[0]
    num_mid = len(mid_params)

    # Transposed, batch-on-lane layout for the kernel.
    xT = x.T                       # (D, B)
    b1c = b1.reshape(H, 1)
    bfc = bf.reshape(D, 1)
    flat_mid = []
    for wm, bm in mid_params:
        flat_mid += [wm, bm.reshape(H, 1)]

    # Tile the lane (batch) axis.  128-wide tiles keep lanes dense and, for
    # B >= 256, give >=2 parallel grid steps (v7x megacore).  Otherwise use a
    # single full-batch tile (full-dim blocks always satisfy the (8,128) rule).
    if B % 128 == 0 and B >= 256:
        block_b = 128
    else:
        block_b = B
    grid = (B // block_b,)

    rep = lambda i: (0, 0)  # weights/biases replicated across batch tiles
    in_specs = [
        pl.BlockSpec((D, block_b), lambda i: (0, i)),   # xT tile
        pl.BlockSpec((H, D), rep),                      # w1
        pl.BlockSpec((H, 1), rep),                      # b1
    ]
    for _ in range(num_mid):
        in_specs += [pl.BlockSpec((H, H), rep),         # wm
                     pl.BlockSpec((H, 1), rep)]         # bm
    in_specs += [pl.BlockSpec((D, H), rep),             # wf
                 pl.BlockSpec((D, 1), rep)]             # bf

    out_specs = pl.BlockSpec((D, block_b), lambda i: (0, i))

    kernel = _make_odefunc_kernel(num_mid, use_tanh)
    outT = pl.pallas_call(
        kernel,
        out_shape=jax.ShapeDtypeStruct((D, B), x.dtype),
        grid=grid,
        in_specs=in_specs,
        out_specs=out_specs,
        compiler_params=pltpu.CompilerParams(
            dimension_semantics=("parallel",),
            vmem_limit_bytes=32 * 1024 * 1024),
    )(xT, w1, b1c, *flat_mid, wf, bfc)
    return outT.T


def _init_linear(key, fan_in, fan_out, dtype=jnp.float32):
    """torch.nn.Linear default init (uniform +-1/sqrt(fan_in)), PyTorch layout.

    Returns weight (fan_out, fan_in) and bias (fan_out,).
    """
    kw, kb = jax.random.split(key)
    bound = 1.0 / jnp.sqrt(jnp.asarray(fan_in, dtype))
    w = jax.random.uniform(kw, (fan_out, fan_in), dtype, -bound, bound)
    b = jax.random.uniform(kb, (fan_out,), dtype, -bound, bound)
    return w, b


def _reference_forward(x, w1, b1, mid_params, wf, bf, use_tanh=False):
    """Plain-JAX reference mirroring the PyTorch forward exactly."""
    act = jnp.tanh if use_tanh else (lambda v: jnp.maximum(v, 0.0))
    h = act(x @ w1.T + b1)
    for wm, bm in mid_params:
        h = act(h @ wm.T + bm)
    return h @ wf.T + bf


if __name__ == "__main__":
    # Shapes consistent with the module's forward:
    #   latent_dim=4, nhidden=32, num_layers=3 (-> 1 middle layer).
    # batch=256 -> two 128-wide lane tiles (parallel grid steps).
    latent_dim = 4
    nhidden = 32
    num_layers = 3
    use_tanh = False
    batch = 256

    key = jax.random.PRNGKey(0)
    kx, k1, kf, *kmids = jax.random.split(key, 3 + (num_layers - 2))

    x = jax.random.normal(kx, (batch, latent_dim), jnp.float32)
    t = jnp.float32(0.0)  # unused by forward

    w1, b1 = _init_linear(k1, latent_dim, nhidden)
    mid_params = [_init_linear(k, nhidden, nhidden) for k in kmids]
    wf, bf = _init_linear(kf, nhidden, latent_dim)

    out = ode_func_forward(t, x, w1, b1, mid_params, wf, bf, use_tanh=use_tanh)
    out = jax.block_until_ready(out)

    ref = _reference_forward(x, w1, b1, mid_params, wf, bf, use_tanh=use_tanh)
    assert out.shape == (batch, latent_dim)
    assert jnp.allclose(out, ref, atol=1e-5, rtol=1e-5), "mismatch vs JAX reference"

    print("KERNEL_OK")
</pallas_src>

<mosaic_0001>
module attributes {stable_mosaic.version = 11 : i64} {
  func.func @kernel(%arg0: i32, %arg1: memref<4x128xf32, #tpu.memory_space<vmem>>, %arg2: memref<32x4xf32, #tpu.memory_space<vmem>>, %arg3: memref<32x1xf32, #tpu.memory_space<vmem>>, %arg4: memref<32x32xf32, #tpu.memory_space<vmem>>, %arg5: memref<32x1xf32, #tpu.memory_space<vmem>>, %arg6: memref<4x32xf32, #tpu.memory_space<vmem>>, %arg7: memref<4x1xf32, #tpu.memory_space<vmem>>, %arg8: memref<4x128xf32, #tpu.memory_space<vmem>>) attributes {dimension_semantics = [#tpu.dimension_semantics<parallel>], iteration_bounds = array<i64: 2>, scalar_prefetch = 0 : i64, scratch_operands = 0 : i64, tpu.core_type = #tpu.core_type<tc>, window_params = [{transform_indices = @transform_0, window_bounds = array<i64: 4, 128>}, {pipeline_mode = #tpu.pipeline_mode<synchronous>, transform_indices = @transform_1, window_bounds = array<i64: 32, 4>}, {pipeline_mode = #tpu.pipeline_mode<synchronous>, transform_indices = @transform_2, window_bounds = array<i64: 32, 1>}, {pipeline_mode = #tpu.pipeline_mode<synchronous>, transform_indices = @transform_3, window_bounds = array<i64: 32, 32>}, {pipeline_mode = #tpu.pipeline_mode<synchronous>, transform_indices = @transform_4, window_bounds = array<i64: 32, 1>}, {pipeline_mode = #tpu.pipeline_mode<synchronous>, transform_indices = @transform_5, window_bounds = array<i64: 4, 32>}, {pipeline_mode = #tpu.pipeline_mode<synchronous>, transform_indices = @transform_6, window_bounds = array<i64: 4, 1>}, {transform_indices = @transform_7, window_bounds = array<i64: 4, 128>}]} {
    %c0 = arith.constant 0 : index
    %c0_0 = arith.constant 0 : index
    %0 = vector.load %arg2[%c0, %c0_0] : memref<32x4xf32, #tpu.memory_space<vmem>>, vector<32x4xf32>
    %c0_1 = arith.constant 0 : index
    %c0_2 = arith.constant 0 : index
    %1 = vector.load %arg1[%c0_1, %c0_2] : memref<4x128xf32, #tpu.memory_space<vmem>>, vector<4x128xf32>
    %cst = arith.constant dense<0.000000e+00> : vector<32x128xf32>
    %2 = tpu.matmul %0, %1, %cst {dimension_numbers = #tpu.dot_dimension_numbers<[1], [0], [0], [1], [0, 0, 1, 1], [], []>} : vector<32x4xf32>, vector<4x128xf32>, vector<32x128xf32> -> vector<32x128xf32>
    %c0_3 = arith.constant 0 : index
    %c0_4 = arith.constant 0 : index
    %3 = vector.load %arg3[%c0_3, %c0_4] : memref<32x1xf32, #tpu.memory_space<vmem>>, vector<32x1xf32>
    %4 = vector.broadcast %3 : vector<32x1xf32> to vector<32x128xf32>
    %5 = arith.addf %2, %4 : vector<32x128xf32>
    %cst_5 = arith.constant 0.000000e+00 : f32
    %6 = vector.broadcast %cst_5 : f32 to vector<32x128xf32>
    %7 = arith.maximumf %5, %6 : vector<32x128xf32>
    %c0_6 = arith.constant 0 : index
    %c0_7 = arith.constant 0 : index
    %8 = vector.load %arg4[%c0_6, %c0_7] : memref<32x32xf32, #tpu.memory_space<vmem>>, vector<32x32xf32>
    %cst_8 = arith.constant dense<0.000000e+00> : vector<32x128xf32>
    %9 = tpu.matmul %8, %7, %cst_8 {dimension_numbers = #tpu.dot_dimension_numbers<[1], [0], [0], [1], [0, 0, 1, 1], [], []>} : vector<32x32xf32>, vector<32x128xf32>, vector<32x128xf32> -> vector<32x128xf32>
    %c0_9 = arith.constant 0 : index
    %c0_10 = arith.constant 0 : index
    %10 = vector.load %arg5[%c0_9, %c0_10] : memref<32x1xf32, #tpu.memory_space<vmem>>, vector<32x1xf32>
    %11 = vector.broadcast %10 : vector<32x1xf32> to vector<32x128xf32>
    %12 = arith.addf %9, %11 : vector<32x128xf32>
    %cst_11 = arith.constant 0.000000e+00 : f32
    %13 = vector.broadcast %cst_11 : f32 to vector<32x128xf32>
    %14 = arith.maximumf %12, %13 : vector<32x128xf32>
    %c0_12 = arith.constant 0 : index
    %c0_13 = arith.constant 0 : index
    %15 = vector.load %arg6[%c0_12, %c0_13] : memref<4x32xf32, #tpu.memory_space<vmem>>, vector<4x32xf32>
    %cst_14 = arith.constant dense<0.000000e+00> : vector<4x128xf32>
    %16 = tpu.matmul %15, %14, %cst_14 {dimension_numbers = #tpu.dot_dimension_numbers<[1], [0], [0], [1], [0, 0, 1, 1], [], []>} : vector<4x32xf32>, vector<32x128xf32>, vector<4x128xf32> -> vector<4x128xf32>
    %c0_15 = arith.constant 0 : index
    %c0_16 = arith.constant 0 : index
    %17 = vector.load %arg7[%c0_15, %c0_16] : memref<4x1xf32, #tpu.memory_space<vmem>>, vector<4x1xf32>
    %18 = vector.broadcast %17 : vector<4x1xf32> to vector<4x128xf32>
    %19 = arith.addf %16, %18 : vector<4x128xf32>
    %c0_17 = arith.constant 0 : index
    %c0_18 = arith.constant 0 : index
    %20 = vector.load %arg8[%c0_17, %c0_18] : memref<4x128xf32, #tpu.memory_space<vmem>>, vector<4x128xf32>
    tpu.vector_store %arg8[%c0_17, %c0_18], %19 {strides = array<i32>} : memref<4x128xf32, #tpu.memory_space<vmem>>, vector<4x128xf32>,
    return
  }
  func.func @transform_0(%arg0: i32) -> (i32, i32) {
    %c0_i32 = arith.constant 0 : i32
    %c0_i32_0 = arith.constant 0 : i32
    return %c0_i32, %arg0 : i32, i32
  }
  func.func @transform_1(%arg0: i32) -> (i32, i32) {
    %c0_i32 = arith.constant 0 : i32
    %c0_i32_0 = arith.constant 0 : i32
    %c0_i32_1 = arith.constant 0 : i32
    return %c0_i32, %c0_i32_0 : i32, i32
  }
  func.func @transform_2(%arg0: i32) -> (i32, i32) {
    %c0_i32 = arith.constant 0 : i32
    %c0_i32_0 = arith.constant 0 : i32
    %c0_i32_1 = arith.constant 0 : i32
    return %c0_i32, %c0_i32_0 : i32, i32
  }
  func.func @transform_3(%arg0: i32) -> (i32, i32) {
    %c0_i32 = arith.constant 0 : i32
    %c0_i32_0 = arith.constant 0 : i32
    %c0_i32_1 = arith.constant 0 : i32
    return %c0_i32, %c0_i32_0 : i32, i32
  }
  func.func @transform_4(%arg0: i32) -> (i32, i32) {
    %c0_i32 = arith.constant 0 : i32
    %c0_i32_0 = arith.constant 0 : i32
    %c0_i32_1 = arith.constant 0 : i32
    return %c0_i32, %c0_i32_0 : i32, i32
  }
  func.func @transform_5(%arg0: i32) -> (i32, i32) {
    %c0_i32 = arith.constant 0 : i32
    %c0_i32_0 = arith.constant 0 : i32
    %c0_i32_1 = arith.constant 0 : i32
    return %c0_i32, %c0_i32_0 : i32, i32
  }
  func.func @transform_6(%arg0: i32) -> (i32, i32) {
    %c0_i32 = arith.constant 0 : i32
    %c0_i32_0 = arith.constant 0 : i32
    %c0_i32_1 = arith.constant 0 : i32
    return %c0_i32, %c0_i32_0 : i32, i32
  }
  func.func @transform_7(%arg0: i32) -> (i32, i32) {
    %c0_i32 = arith.constant 0 : i32
    %c0_i32_0 = arith.constant 0 : i32
    return %c0_i32, %arg0 : i32, i32
  }
}

</mosaic_0001>

<llo_original>
// kernel: tpu_custom_call.1
$region0: #{tpu_custom_call.1}
  #allocation0 [shape = 'u32[]', space=smem, size = 0x4, offset = 0x4, fixed_abs, tag = 'smem constant byte address 0x4 - core index']
  #allocation1 [shape = 'u32[144,128]{1,0:T(1,128)}', space=vmem, size = 0x12000, scoped, tag = 'internal scratch']
  %s0 = inlined_call_operand.vmem [shape: f32[4,256], index: 0, kind: input, shape index: {}]
  %s1 = inlined_call_operand.vmem [shape: f32[32,4], index: 1, kind: input, shape index: {}]
  %s2 = inlined_call_operand.vmem [shape: f32[32,1], index: 2, kind: input, shape index: {}]
  %s3 = inlined_call_operand.vmem [shape: f32[32,32], index: 3, kind: input, shape index: {}]
  %s4 = inlined_call_operand.vmem [shape: f32[32,1], index: 4, kind: input, shape index: {}]
  %s5 = inlined_call_operand.vmem [shape: f32[4,32], index: 5, kind: input, shape index: {}]
  %s6 = inlined_call_operand.vmem [shape: f32[4,1], index: 6, kind: input, shape index: {}]
  %s7 = inlined_call_operand.hbm [shape: f32[4,256], index: 7, kind: output, shape index: {}]
  %s8 = sld [smem:[#allocation0]]
  $region61: #{tpu_custom_call.1} parent=0
    _
  %s10 = ssub.s32 1, %s8
  %s11 = scalar_select 0, %s10, %s8
  $region1: #{tpu_custom_call.1} parent=0
    #allocation2 [shape = 'u8[4096]{0}', space=vmem, size = 0x1000, scoped, tag = 'output window, operand 0']
    #allocation3 [shape = 's32[2]{0}', space=sflag, size = 0x8, scoped, tag = 'scoped memory for tpu_custom_call.1']
    %12 = vsyncpa [#allocation3], 0
    %s13 = scalar_lea.sflag [#allocation3], 1
    %14 = vsyncpa %s13, 0
    loop: start=0, step=1, limit=4
    $region2: #{tpu_custom_call.1} parent=1 // loop_pre_header
      _
    $region3: #{tpu_custom_call.1} parent=1 // loop_header
      %s16 = sphi 0, %s20
      %p17 = scmp.ge.s32.totalorder %s16, 4
      %s26 = sphi 0, %s28
      %s29 = sphi 0, %s26
      %s30 = sphi 0, %s29
      %s46 = sphi 0, %s30
      %s50 = sphi 0, %s50
      %s52 = sphi 0, %s50
      %s53 = sphi 0, %s52
      %s67 = sphi 0, %s53
      %s71 = sphi 0, %s71
      %s73 = sphi 0, %s71
      %s74 = sphi 0, %s73
      %s88 = sphi 0, %s74
      %s92 = sphi 0, %s92
      %s94 = sphi 0, %s92
      %s95 = sphi 0, %s94
      %s109 = sphi 0, %s95
      %s113 = sphi 0, %s113
      %s115 = sphi 0, %s113
      %s116 = sphi 0, %s115
      %s130 = sphi 0, %s116
      %s134 = sphi 0, %s134
      %s136 = sphi 0, %s134
      %s137 = sphi 0, %s136
      %s151 = sphi 0, %s137
      %s155 = sphi 0, %s155
      %s157 = sphi 0, %s155
      %s158 = sphi 0, %s157
      %s172 = sphi 0, %s158
      %s178 = sphi 0, %s180
      %s181 = sphi 0, %s178
      %s182 = sphi 0, %s181
      %s198 = sphi 0, %s182
    $region4: #{tpu_custom_call.1} parent=1 // loop_header_branch
      %19 = sbr.rel (%p17) target = $region8
    $region5: #{tpu_custom_call.1} parent=1 // loop_body
      %s21 = ssub.s32 %s16, 1
      %s22 = ssub.s32 %s16, 2
      %s23 = sadd.s32 %s16, 1
      %s24 = ssub.s32 %s16, %s23
      %p25 = scmp.eq.s32.totalorder %s24, 0
      %s27 = sadd.s32 %s26, 1
      %s28 = scalar_select %p25, %s26, %s27
      %p31 = pneg %p25
      %p32 = scmp.eq.s32.totalorder %s16, 1
      %p33 = por %p31, %p32
      %p34 = scmp.ne.s32.totalorder %s26, %s29
      %p35 = scmp.eq.s32.totalorder %s16, 0
      %p36 = por %p34, %p35
      %p37 = scmp.ne.s32.totalorder %s26, %s29
      %p38 = scmp.eq.s32.totalorder %s21, 1
      %p39 = por %p37, %p38
      %p40 = scmp.ne.s32.totalorder %s29, %s30
      %p41 = scmp.eq.s32.totalorder %s21, 0
      %p42 = por %p40, %p41
      %p43 = scmp.ne.s32.totalorder %s29, %s30
      %p44 = scmp.eq.s32.totalorder %s22, 1
      %p45 = por %p43, %p44
      %p47 = scmp.ne.s32.totalorder %s30, %s46
      %p48 = scmp.eq.s32.totalorder %s22, 0
      %p49 = por %p47, %p48
      %s51 = sadd.s32 %s50, 1
      %p54 = scmp.eq.s32.totalorder %s16, 1
      %p55 = scmp.ne.s32.totalorder %s50, %s52
      %p56 = scmp.eq.s32.totalorder %s16, 0
      %p57 = por %p55, %p56
      %p58 = scmp.ne.s32.totalorder %s50, %s52
      %p59 = scmp.eq.s32.totalorder %s21, 1
      %p60 = por %p58, %p59
      %p61 = scmp.ne.s32.totalorder %s52, %s53
      %p62 = scmp.eq.s32.totalorder %s21, 0
      %p63 = por %p61, %p62
      %p64 = scmp.ne.s32.totalorder %s52, %s53
      %p65 = scmp.eq.s32.totalorder %s22, 1
      %p66 = por %p64, %p65
      %p68 = scmp.ne.s32.totalorder %s53, %s67
      %p69 = scmp.eq.s32.totalorder %s22, 0
      %p70 = por %p68, %p69
      %s72 = sadd.s32 %s71, 1
      %p75 = scmp.eq.s32.totalorder %s16, 1
      %p76 = scmp.ne.s32.totalorder %s71, %s73
      %p77 = scmp.eq.s32.totalorder %s16, 0
      %p78 = por %p76, %p77
      %p79 = scmp.ne.s32.totalorder %s71, %s73
      %p80 = scmp.eq.s32.totalorder %s21, 1
      %p81 = por %p79, %p80
      %p82 = scmp.ne.s32.totalorder %s73, %s74
      %p83 = scmp.eq.s32.totalorder %s21, 0
      %p84 = por %p82, %p83
      %p85 = scmp.ne.s32.totalorder %s73, %s74
      %p86 = scmp.eq.s32.totalorder %s22, 1
      %p87 = por %p85, %p86
      %p89 = scmp.ne.s32.totalorder %s74, %s88
      %p90 = scmp.eq.s32.totalorder %s22, 0
      %p91 = por %p89, %p90
      %s93 = sadd.s32 %s92, 1
      %p96 = scmp.eq.s32.totalorder %s16, 1
      %p97 = scmp.ne.s32.totalorder %s92, %s94
      %p98 = scmp.eq.s32.totalorder %s16, 0
      %p99 = por %p97, %p98
      %p100 = scmp.ne.s32.totalorder %s92, %s94
      %p101 = scmp.eq.s32.totalorder %s21, 1
      %p102 = por %p100, %p101
      %p103 = scmp.ne.s32.totalorder %s94, %s95
      %p104 = scmp.eq.s32.totalorder %s21, 0
      %p105 = por %p103, %p104
      %p106 = scmp.ne.s32.totalorder %s94, %s95
      %p107 = scmp.eq.s32.totalorder %s22, 1
      %p108 = por %p106, %p107
      %p110 = scmp.ne.s32.totalorder %s95, %s109
      %p111 = scmp.eq.s32.totalorder %s22, 0
      %p112 = por %p110, %p111
      %s114 = sadd.s32 %s113, 1
      %p117 = scmp.eq.s32.totalorder %s16, 1
      %p118 = scmp.ne.s32.totalorder %s113, %s115
      %p119 = scmp.eq.s32.totalorder %s16, 0
      %p120 = por %p118, %p119
      %p121 = scmp.ne.s32.totalorder %s113, %s115
      %p122 = scmp.eq.s32.totalorder %s21, 1
      %p123 = por %p121, %p122
      %p124 = scmp.ne.s32.totalorder %s115, %s116
      %p125 = scmp.eq.s32.totalorder %s21, 0
      %p126 = por %p124, %p125
      %p127 = scmp.ne.s32.totalorder %s115, %s116
      %p128 = scmp.eq.s32.totalorder %s22, 1
      %p129 = por %p127, %p128
      %p131 = scmp.ne.s32.totalorder %s116, %s130
      %p132 = scmp.eq.s32.totalorder %s22, 0
      %p133 = por %p131, %p132
      %s135 = sadd.s32 %s134, 1
      %p138 = scmp.eq.s32.totalorder %s16, 1
      %p139 = scmp.ne.s32.totalorder %s134, %s136
      %p140 = scmp.eq.s32.totalorder %s16, 0
      %p141 = por %p139, %p140
      %p142 = scmp.ne.s32.totalorder %s134, %s136
      %p143 = scmp.eq.s32.totalorder %s21, 1
      %p144 = por %p142, %p143
      %p145 = scmp.ne.s32.totalorder %s136, %s137
      %p146 = scmp.eq.s32.totalorder %s21, 0
      %p147 = por %p145, %p146
      %p148 = scmp.ne.s32.totalorder %s136, %s137
      %p149 = scmp.eq.s32.totalorder %s22, 1
      %p150 = por %p148, %p149
      %p152 = scmp.ne.s32.totalorder %s137, %s151
      %p153 = scmp.eq.s32.totalorder %s22, 0
      %p154 = por %p152, %p153
      %s156 = sadd.s32 %s155, 1
      %p159 = scmp.eq.s32.totalorder %s16, 1
      %p160 = scmp.ne.s32.totalorder %s155, %s157
      %p161 = scmp.eq.s32.totalorder %s16, 0
      %p162 = por %p160, %p161
      %p163 = scmp.ne.s32.totalorder %s155, %s157
      %p164 = scmp.eq.s32.totalorder %s21, 1
      %p165 = por %p163, %p164
      %p166 = scmp.ne.s32.totalorder %s157, %s158
      %p167 = scmp.eq.s32.totalorder %s21, 0
      %p168 = por %p166, %p167
      %p169 = scmp.ne.s32.totalorder %s157, %s158
      %p170 = scmp.eq.s32.totalorder %s22, 1
      %p171 = por %p169, %p170
      %p173 = scmp.ne.s32.totalorder %s158, %s172
      %p174 = scmp.eq.s32.totalorder %s22, 0
      %p175 = por %p173, %p174
      %s176 = ssub.s32 %s16, %s23
      %p177 = scmp.eq.s32.totalorder %s176, 0
      %s179 = sadd.s32 %s178, 1
      %s180 = scalar_select %p177, %s178, %s179
      %p183 = pneg %p177
      %p184 = scmp.eq.s32.totalorder %s16, 1
      %p185 = por %p183, %p184
      %p186 = scmp.ne.s32.totalorder %s178, %s181
      %p187 = scmp.eq.s32.totalorder %s16, 0
      %p188 = por %p186, %p187
      %p189 = scmp.ne.s32.totalorder %s178, %s181
      %p190 = scmp.eq.s32.totalorder %s21, 1
      %p191 = por %p189, %p190
      %p192 = scmp.ne.s32.totalorder %s181, %s182
      %p193 = scmp.eq.s32.totalorder %s21, 0
      %p194 = por %p192, %p193
      %p195 = scmp.ne.s32.totalorder %s181, %s182
      %p196 = scmp.eq.s32.totalorder %s22, 1
      %p197 = por %p195, %p196
      %p199 = scmp.ne.s32.totalorder %s182, %s198
      %p200 = scmp.eq.s32.totalorder %s22, 0
      %p201 = por %p199, %p200
      %p202 = scmp.le.s32.totalorder 1, %s16
      %p203 = scmp.lt.s32.totalorder %s16, 3
      %p204 = pnand %p202, %p203
      %p205 = pneg %p204
      // Predicated region
      $region9: #{tpu_custom_call.1} parent=5 // pred_check
        _
      $region10: #{tpu_custom_call.1} parent=5 // pred_check_branch
        %207 = sbr.rel (%p204) target = $region12
      $region11: #{tpu_custom_call.1} parent=5 // pred_region
        %s208 = ssub.s32 %s16, 1
        // Predicated region
        $region13: #{tpu_custom_call.1} parent=11 // pred_check
          %p209 = pneg %p63
        $region14: #{tpu_custom_call.1} parent=11 // pred_check_branch
          %211 = sbr.rel (%p209) target = $region16
        $region15: #{tpu_custom_call.1} parent=11 // pred_region
          _
        $region16: #{tpu_custom_call.1} parent=11 // pred_fallthru
          _
        // Predicated region
        $region17: #{tpu_custom_call.1} parent=11 // pred_check
          %p212 = pneg %p84
        $region18: #{tpu_custom_call.1} parent=11 // pred_check_branch
          %214 = sbr.rel (%p212) target = $region20
        $region19: #{tpu_custom_call.1} parent=11 // pred_region
          _
        $region20: #{tpu_custom_call.1} parent=11 // pred_fallthru
          _
        // Predicated region
        $region21: #{tpu_custom_call.1} parent=11 // pred_check
          %p215 = pneg %p105
        $region22: #{tpu_custom_call.1} parent=11 // pred_check_branch
          %217 = sbr.rel (%p215) target = $region24
        $region23: #{tpu_custom_call.1} parent=11 // pred_region
          _
        $region24: #{tpu_custom_call.1} parent=11 // pred_fallthru
          _
        // Predicated region
        $region25: #{tpu_custom_call.1} parent=11 // pred_check
          %p218 = pneg %p126
        $region26: #{tpu_custom_call.1} parent=11 // pred_check_branch
          %220 = sbr.rel (%p218) target = $region28
        $region27: #{tpu_custom_call.1} parent=11 // pred_region
          _
        $region28: #{tpu_custom_call.1} parent=11 // pred_fallthru
          _
        // Predicated region
        $region29: #{tpu_custom_call.1} parent=11 // pred_check
          %p221 = pneg %p147
        $region30: #{tpu_custom_call.1} parent=11 // pred_check_branch
          %223 = sbr.rel (%p221) target = $region32
        $region31: #{tpu_custom_call.1} parent=11 // pred_region
          _
        $region32: #{tpu_custom_call.1} parent=11 // pred_fallthru
          _
        // Predicated region
        $region33: #{tpu_custom_call.1} parent=11 // pred_check
          %p224 = pneg %p168
        $region34: #{tpu_custom_call.1} parent=11 // pred_check_branch
          %226 = sbr.rel (%p224) target = $region36
        $region35: #{tpu_custom_call.1} parent=11 // pred_region
          _
        $region36: #{tpu_custom_call.1} parent=11 // pred_fallthru
          _
      $region12: #{tpu_custom_call.1} parent=5 // pred_fallthru
        _
      %p227 = scmp.lt.s32.totalorder %s16, 2
      // Predicated region
      $region37: #{tpu_custom_call.1} parent=5 // pred_check
        %p228 = pneg %p227
      $region38: #{tpu_custom_call.1} parent=5 // pred_check_branch
        %230 = sbr.rel (%p228) target = $region40
      $region39: #{tpu_custom_call.1} parent=5 // pred_region
        // Predicated region
        $region41: #{tpu_custom_call.1} parent=39 // pred_check
          %p231 = pneg %p36
        $region42: #{tpu_custom_call.1} parent=39 // pred_check_branch
          %233 = sbr.rel (%p231) target = $region44
        $region43: #{tpu_custom_call.1} parent=39 // pred_region
          %p234 = scmp.lt.s32.totalorder %s16, 1
          %s235 = scalar_select %p234, %s16, 1
          %s236 = smul.addr %s235, 4
          %s237 = scalar_lea.vmem %s0, %s236
        $region44: #{tpu_custom_call.1} parent=39 // pred_fallthru
          _
      $region40: #{tpu_custom_call.1} parent=5 // pred_fallthru
        _
      %p238 = scmp.le.s32.totalorder 1, %s16
      %p239 = scmp.lt.s32.totalorder %s16, 3
      %p240 = pnand %p238, %p239
      %p241 = pneg %p240
      // Predicated region
      $region45: #{tpu_custom_call.1} parent=5 // pred_check
        _
      $region46: #{tpu_custom_call.1} parent=5 // pred_check_branch
        %243 = sbr.rel (%p240) target = $region48
      $region47: #{tpu_custom_call.1} parent=5 // pred_region
        %s244 = ssub.s32 %s16, 1
        %p245 = scmp.lt.s32.totalorder %s21, 1
        %s246 = scalar_select %p245, %s21, 1
        %s247 = smul.addr %s246, 4
        %s248 = scalar_lea.vmem %s0, %s247
        %p249 = pneg %p42
        %p250 = pneg %p39
        %p251 = pneg %p63
        %p252 = pneg %p60
        %p253 = pneg %p84
        %p254 = pneg %p81
        %p255 = pneg %p105
        %p256 = pneg %p102
        %p257 = pneg %p126
        %p258 = pneg %p123
        %p259 = pneg %p147
        %p260 = pneg %p144
        %p261 = pneg %p168
        %p262 = pneg %p165
        %p263 = pneg %p194
        %p264 = pneg %p191
        %s265 = sand.u32 %s181, 1
        %s266 = scalar_lea.sflag [#allocation3], %s265
        %s267 = sand.u32 %s181, 1
        %s268 = smul.addr %s267, 4
        %s269 = scalar_lea.vmem [#allocation2], %s268
        %p270 = scmp.lt.s32.totalorder %s21, 1
        %s271 = scalar_select %p270, %s21, 1
        %s272 = smul.addr %s271, 4
        %s273 = scalar_lea.vmem %s0, %s272
        %v274 = vld [vmem:[%s1] sm:$0xff]
        %v275 = vld [vmem:[%s1 + $0x8] sm:$0xff]
        %v276 = vld [vmem:[%s1 + $0x10] sm:$0xff]
        %v277 = vld [vmem:[%s1 + $0x18] sm:$0xff]
        %v278 = vld [vmem:[%s273] sm:$0xf]
        %v279 = vld [vmem:[%s2] sm:$0xff]
        %v280 = vld [vmem:[%s2 + $0x8] sm:$0xff]
        %v281 = vld [vmem:[%s2 + $0x10] sm:$0xff]
        %v282 = vld [vmem:[%s2 + $0x18] sm:$0xff]
        %284 = vset.pattern.permute.xlu0 0
        %285 = vperm.xlu0 %284, %v279
        %v286 = vpop.permute.xlu0 %285
        %289 = vset.pattern.permute.xlu0 0
        %290 = vperm.xlu0 %289, %v280
        %v291 = vpop.permute.xlu0 %290
        %294 = vset.pattern.permute.xlu0 0
        %295 = vperm.xlu0 %294, %v281
        %v296 = vpop.permute.xlu0 %295
        %299 = vset.pattern.permute.xlu0 0
        %300 = vperm.xlu0 %299, %v282
        %v301 = vpop.permute.xlu0 %300
        %vm303 = vcmask 31744
        %v305 = vsel %vm303, %v274, 0
        %v308 = vsel %vm303, %v275, 0
        %v311 = vsel %vm303, %v276, 0
        %v314 = vsel %vm303, %v277, 0
        %vm316 = vcmask 1043456
        %v318 = vsel %vm316, %v278, 0
        %320 = vmatprep.subr.mxu0 0.0
        %321 = vmatpush1.msra.mxu0 %v318
        %322 = vmatprep.subr.mxu0 0.0
        %323 = vmatpush1.msra.mxu0 0.0
        %324 = vmatprep.subr.mxu0 0.0
        %325 = vmatpush1.msra.mxu0 0.0
        %326 = vmatprep.subr.mxu0 0.0
        %327 = vmatpush1.msra.mxu0 0.0
        %328 = vmatprep.subr.mxu0 0.0
        %329 = vmatpush1.msra.mxu0 0.0
        %330 = vmatprep.subr.mxu0 0.0
        %331 = vmatpush1.msra.mxu0 0.0
        %332 = vmatprep.subr.mxu0 0.0
        %333 = vmatpush1.msra.mxu0 0.0
        %334 = vmatprep.subr.mxu0 0.0
        %335 = vmatpush1.msra.mxu0 0.0
        %336 = vmatprep.subr.mxu0 0.0
        %337 = vmatpush1.msra.mxu0 0.0
        %338 = vmatprep.subr.mxu0 0.0
        %339 = vmatpush1.msra.mxu0 0.0
        %340 = vmatprep.subr.mxu0 0.0
        %341 = vmatpush1.msra.mxu0 0.0
        %342 = vmatprep.subr.mxu0 0.0
        %343 = vmatpush1.msra.mxu0 0.0
        %344 = vmatprep.subr.mxu0 0.0
        %345 = vmatpush1.msra.mxu0 0.0
        %346 = vmatprep.subr.mxu0 0.0
        %347 = vmatpush1.msra.mxu0 0.0
        %348 = vmatprep.subr.mxu0 0.0
        %349 = vmatpush1.msra.mxu0 0.0
        %350 = vmatprep.subr.mxu0 0.0
        %351 = vmatpush1.msra.mxu0 0.0
        %352 = vmatprep.subr.mxu0 0.0
        %353 = vmatpush1.msra.mxu0 0.0
        %354 = vmatprep.subr.mxu0 0.0
        %355 = vmatpush1.msra.mxu0 0.0
        %356 = vmatprep.subr.mxu0 0.0
        %357 = vmatpush1.msra.mxu0 0.0
        %358 = vmatprep.subr.mxu0 0.0
        %359 = vmatpush1.msra.mxu0 0.0
        %360 = vmatprep.subr.mxu0 0.0
        %361 = vmatpush1.msra.mxu0 0.0
        %362 = vmatprep.subr.mxu0 0.0
        %363 = vmatpush1.msra.mxu0 0.0
        %364 = vmatprep.subr.mxu0 0.0
        %365 = vmatpush1.msra.mxu0 0.0
        %366 = vmatprep.subr.mxu0 0.0
        %367 = vmatpush1.msra.mxu0 0.0
        %368 = vmatprep.subr.mxu0 0.0
        %369 = vmatpush1.msra.mxu0 0.0
        %370 = vmatprep.subr.mxu0 0.0
        %371 = vmatpush1.msra.mxu0 0.0
        %372 = vmatprep.subr.mxu0 0.0
        %373 = vmatpush1.msra.mxu0 0.0
        %374 = vmatprep.subr.mxu0 0.0
        %375 = vmatpush1.msra.mxu0 0.0
        %376 = vmatprep.subr.mxu0 0.0
        %377 = vmatpush1.msra.mxu0 0.0
        %378 = vmatprep.subr.mxu0 0.0
        %379 = vmatpush1.msra.mxu0 0.0
        %380 = vmatprep.subr.mxu0 0.0
        %381 = vmatpush1.msra.mxu0 0.0
        %382 = vmatprep.subr.mxu0 0.0
        %383 = vmatpush1.msra.mxu0 0.0
        %384 = vmatprep.mubr.f32.mxu0 0.0
        %385 = vmatmul.mubr.f32.gmra.mrb[0].mxu0 %v305
        %v386 = vpop.f32.mrb[0].mxu0
        %v387 = vadd.f32 %v286, %v386
        %v388 = vpop.f32.mrb[0].mxu0
        %389 = vmatprep.mubr.f32.mxu0 0.0
        %390 = vmatmul.mubr.f32.gmra.mrb[0].mxu0 %v308
        %v391 = vpop.f32.mrb[0].mxu0
        %v392 = vadd.f32 %v291, %v391
        %v393 = vpop.f32.mrb[0].mxu0
        %394 = vmatprep.mubr.f32.mxu0 0.0
        %395 = vmatmul.mubr.f32.gmra.mrb[0].mxu0 %v311
        %v396 = vpop.f32.mrb[0].mxu0
        %v397 = vadd.f32 %v296, %v396
        %v398 = vpop.f32.mrb[0].mxu0
        %399 = vmatprep.mubr.f32.mxu0 0.0
        %400 = vmatmul.mubr.f32.gmra.mrb[0].mxu0 %v314
        %v401 = vpop.f32.mrb[0].mxu0
        %v402 = vadd.f32 %v301, %v401
        %v403 = vpop.f32.mrb[0].mxu0
        %404 = vdwg.mxu0
        %v405 = vmax.f32 %v387, 0.0
        %v406 = vmax.f32 %v392, 0.0
        %v407 = vmax.f32 %v397, 0.0
        %v408 = vmax.f32 %v402, 0.0
        %v409 = vld [vmem:[%s3] sm:$0xff]
        %v410 = vld [vmem:[%s3 + $0x8] sm:$0xff]
        %v411 = vld [vmem:[%s3 + $0x10] sm:$0xff]
        %v412 = vld [vmem:[%s3 + $0x18] sm:$0xff]
        %v413 = vld [vmem:[%s4] sm:$0xff]
        %v414 = vld [vmem:[%s4 + $0x8] sm:$0xff]
        %v415 = vld [vmem:[%s4 + $0x10] sm:$0xff]
        %v416 = vld [vmem:[%s4 + $0x18] sm:$0xff]
        %418 = vset.pattern.permute.xlu0 0
        %419 = vperm.xlu0 %418, %v413
        %v420 = vpop.permute.xlu0 %419
        %423 = vset.pattern.permute.xlu0 0
        %424 = vperm.xlu0 %423, %v414
        %v425 = vpop.permute.xlu0 %424
        %428 = vset.pattern.permute.xlu0 0
        %429 = vperm.xlu0 %428, %v415
        %v430 = vpop.permute.xlu0 %429
        %433 = vset.pattern.permute.xlu0 0
        %434 = vperm.xlu0 %433, %v416
        %v435 = vpop.permute.xlu0 %434
        %vm437 = vcmask 261120
        %v439 = vsel %vm437, %v409, 0
        %v442 = vsel %vm437, %v410, 0
        %v445 = vsel %vm437, %v411, 0
        %v448 = vsel %vm437, %v412, 0
        %450 = vmatprep.subr.mxu0 0.0
        %451 = vmatpush1.msra.mxu0 %v405
        %452 = vmatprep.subr.mxu0 0.0
        %453 = vmatpush1.msra.mxu0 %v406
        %454 = vmatprep.subr.mxu0 0.0
        %455 = vmatpush1.msra.mxu0 %v407
        %456 = vmatprep.subr.mxu0 0.0
        %457 = vmatpush1.msra.mxu0 %v408
        %458 = vmatprep.subr.mxu0 0.0
        %459 = vmatpush1.msra.mxu0 0.0
        %460 = vmatprep.subr.mxu0 0.0
        %461 = vmatpush1.msra.mxu0 0.0
        %462 = vmatprep.subr.mxu0 0.0
        %463 = vmatpush1.msra.mxu0 0.0
        %464 = vmatprep.subr.mxu0 0.0
        %465 = vmatpush1.msra.mxu0 0.0
        %466 = vmatprep.subr.mxu0 0.0
        %467 = vmatpush1.msra.mxu0 0.0
        %468 = vmatprep.subr.mxu0 0.0
        %469 = vmatpush1.msra.mxu0 0.0
        %470 = vmatprep.subr.mxu0 0.0
        %471 = vmatpush1.msra.mxu0 0.0
        %472 = vmatprep.subr.mxu0 0.0
        %473 = vmatpush1.msra.mxu0 0.0
        %474 = vmatprep.subr.mxu0 0.0
        %475 = vmatpush1.msra.mxu0 0.0
        %476 = vmatprep.subr.mxu0 0.0
        %477 = vmatpush1.msra.mxu0 0.0
        %478 = vmatprep.subr.mxu0 0.0
        %479 = vmatpush1.msra.mxu0 0.0
        %480 = vmatprep.subr.mxu0 0.0
        %481 = vmatpush1.msra.mxu0 0.0
        %482 = vmatprep.subr.mxu0 0.0
        %483 = vmatpush1.msra.mxu0 0.0
        %484 = vmatprep.subr.mxu0 0.0
        %485 = vmatpush1.msra.mxu0 0.0
        %486 = vmatprep.subr.mxu0 0.0
        %487 = vmatpush1.msra.mxu0 0.0
        %488 = vmatprep.subr.mxu0 0.0
        %489 = vmatpush1.msra.mxu0 0.0
        %490 = vmatprep.subr.mxu0 0.0
        %491 = vmatpush1.msra.mxu0 0.0
        %492 = vmatprep.subr.mxu0 0.0
        %493 = vmatpush1.msra.mxu0 0.0
        %494 = vmatprep.subr.mxu0 0.0
        %495 = vmatpush1.msra.mxu0 0.0
        %496 = vmatprep.subr.mxu0 0.0
        %497 = vmatpush1.msra.mxu0 0.0
        %498 = vmatprep.subr.mxu0 0.0
        %499 = vmatpush1.msra.mxu0 0.0
        %500 = vmatprep.subr.mxu0 0.0
        %501 = vmatpush1.msra.mxu0 0.0
        %502 = vmatprep.subr.mxu0 0.0
        %503 = vmatpush1.msra.mxu0 0.0
        %504 = vmatprep.subr.mxu0 0.0
        %505 = vmatpush1.msra.mxu0 0.0
        %506 = vmatprep.subr.mxu0 0.0
        %507 = vmatpush1.msra.mxu0 0.0
        %508 = vmatprep.subr.mxu0 0.0
        %509 = vmatpush1.msra.mxu0 0.0
        %510 = vmatprep.subr.mxu0 0.0
        %511 = vmatpush1.msra.mxu0 0.0
        %512 = vmatprep.subr.mxu0 0.0
        %513 = vmatpush1.msra.mxu0 0.0
        %514 = vmatprep.mubr.f32.mxu0 0.0
        %515 = vmatmul.mubr.f32.gmra.mrb[0].mxu0 %v439
        %v516 = vpop.f32.mrb[0].mxu0
        %v517 = vadd.f32 %v420, %v516
        %v518 = vpop.f32.mrb[0].mxu0
        %519 = vmatprep.mubr.f32.mxu0 0.0
        %520 = vmatmul.mubr.f32.gmra.mrb[0].mxu0 %v442
        %v521 = vpop.f32.mrb[0].mxu0
        %v522 = vadd.f32 %v425, %v521
        %v523 = vpop.f32.mrb[0].mxu0
        %524 = vmatprep.mubr.f32.mxu0 0.0
        %525 = vmatmul.mubr.f32.gmra.mrb[0].mxu0 %v445
        %v526 = vpop.f32.mrb[0].mxu0
        %v527 = vadd.f32 %v430, %v526
        %v528 = vpop.f32.mrb[0].mxu0
        %529 = vmatprep.mubr.f32.mxu0 0.0
        %530 = vmatmul.mubr.f32.gmra.mrb[0].mxu0 %v448
        %v531 = vpop.f32.mrb[0].mxu0
        %v532 = vadd.f32 %v435, %v531
        %v533 = vpop.f32.mrb[0].mxu0
        %534 = vdwg.mxu0
        %v535 = vmax.f32 %v517, 0.0
        %v536 = vmax.f32 %v522, 0.0
        %v537 = vmax.f32 %v527, 0.0
        %v538 = vmax.f32 %v532, 0.0
        %v539 = vld [vmem:[%s5] sm:$0xf]
        %v540 = vld [vmem:[%s6] sm:$0xf]
        %542 = vset.pattern.permute.xlu0 0
        %543 = vperm.xlu0 %542, %v540
        %v544 = vpop.permute.xlu0 %543
        %v547 = vsel %vm437, %v539, 0
        %549 = vmatprep.subr.mxu0 0.0
        %550 = vmatpush1.msra.mxu0 %v535
        %551 = vmatprep.subr.mxu0 0.0
        %552 = vmatpush1.msra.mxu0 %v536
        %553 = vmatprep.subr.mxu0 0.0
        %554 = vmatpush1.msra.mxu0 %v537
        %555 = vmatprep.subr.mxu0 0.0
        %556 = vmatpush1.msra.mxu0 %v538
        %557 = vmatprep.subr.mxu0 0.0
        %558 = vmatpush1.msra.mxu0 0.0
        %559 = vmatprep.subr.mxu0 0.0
        %560 = vmatpush1.msra.mxu0 0.0
        %561 = vmatprep.subr.mxu0 0.0
        %562 = vmatpush1.msra.mxu0 0.0
        %563 = vmatprep.subr.mxu0 0.0
        %564 = vmatpush1.msra.mxu0 0.0
        %565 = vmatprep.subr.mxu0 0.0
        %566 = vmatpush1.msra.mxu0 0.0
        %567 = vmatprep.subr.mxu0 0.0
        %568 = vmatpush1.msra.mxu0 0.0
        %569 = vmatprep.subr.mxu0 0.0
        %570 = vmatpush1.msra.mxu0 0.0
        %571 = vmatprep.subr.mxu0 0.0
        %572 = vmatpush1.msra.mxu0 0.0
        %573 = vmatprep.subr.mxu0 0.0
        %574 = vmatpush1.msra.mxu0 0.0
        %575 = vmatprep.subr.mxu0 0.0
        %576 = vmatpush1.msra.mxu0 0.0
        %577 = vmatprep.subr.mxu0 0.0
        %578 = vmatpush1.msra.mxu0 0.0
        %579 = vmatprep.subr.mxu0 0.0
        %580 = vmatpush1.msra.mxu0 0.0
        %581 = vmatprep.subr.mxu0 0.0
        %582 = vmatpush1.msra.mxu0 0.0
        %583 = vmatprep.subr.mxu0 0.0
        %584 = vmatpush1.msra.mxu0 0.0
        %585 = vmatprep.subr.mxu0 0.0
        %586 = vmatpush1.msra.mxu0 0.0
        %587 = vmatprep.subr.mxu0 0.0
        %588 = vmatpush1.msra.mxu0 0.0
        %589 = vmatprep.subr.mxu0 0.0
        %590 = vmatpush1.msra.mxu0 0.0
        %591 = vmatprep.subr.mxu0 0.0
        %592 = vmatpush1.msra.mxu0 0.0
        %593 = vmatprep.subr.mxu0 0.0
        %594 = vmatpush1.msra.mxu0 0.0
        %595 = vmatprep.subr.mxu0 0.0
        %596 = vmatpush1.msra.mxu0 0.0
        %597 = vmatprep.subr.mxu0 0.0
        %598 = vmatpush1.msra.mxu0 0.0
        %599 = vmatprep.subr.mxu0 0.0
        %600 = vmatpush1.msra.mxu0 0.0
        %601 = vmatprep.subr.mxu0 0.0
        %602 = vmatpush1.msra.mxu0 0.0
        %603 = vmatprep.subr.mxu0 0.0
        %604 = vmatpush1.msra.mxu0 0.0
        %605 = vmatprep.subr.mxu0 0.0
        %606 = vmatpush1.msra.mxu0 0.0
        %607 = vmatprep.subr.mxu0 0.0
        %608 = vmatpush1.msra.mxu0 0.0
        %609 = vmatprep.subr.mxu0 0.0
        %610 = vmatpush1.msra.mxu0 0.0
        %611 = vmatprep.subr.mxu0 0.0
        %612 = vmatpush1.msra.mxu0 0.0
        %613 = vmatprep.mubr.f32.mxu0 0.0
        %614 = vmatmul.mubr.f32.gmra.mrb[0].mxu0 %v547
        %v615 = vpop.f32.mrb[0].mxu0
        %v616 = vadd.f32 %v544, %v615
        %v617 = vpop.f32.mrb[0].mxu0
        %618 = vdwg.mxu0
        %619 = vst [vmem:[%s269] sm:$0xf] %v616
        %s620 = sand.u32 %s181, 1
        %s621 = scalar_lea.sflag [#allocation3], %s620
        %s622 = sand.u32 %s181, 1
        %s623 = smul.addr %s622, 4
        %s624 = scalar_lea.vmem [#allocation2], %s623
        // Predicated region
        $region49: #{tpu_custom_call.1} parent=47 // pred_check
          %p625 = pneg %p191
        $region50: #{tpu_custom_call.1} parent=47 // pred_check_branch
          %627 = sbr.rel (%p625) target = $region52
        $region51: #{tpu_custom_call.1} parent=47 // pred_region
          %s629 = ssub.s32 64, 64
          %630 = vsyncadd %s621, %s629
          %s631 = smul.addr %s21, 64
          %s632 = scalar_lea.hbm %s7, %s631
          %s634 = sshll.u32 %s624, 4
          %s635 = int_to_ptr.vmem [resolvable:$true] %s634
          %637 = dma.vmem_to_hbm [thread:$0]  %s635, 64, %s632, %s621
        $region52: #{tpu_custom_call.1} parent=47 // pred_fallthru
          _
      $region48: #{tpu_custom_call.1} parent=5 // pred_fallthru
        _
      %p638 = scmp.le.s32.totalorder 2, %s16
      // Predicated region
      $region53: #{tpu_custom_call.1} parent=5 // pred_check
        %p639 = pneg %p638
      $region54: #{tpu_custom_call.1} parent=5 // pred_check_branch
        %641 = sbr.rel (%p639) target = $region56
      $region55: #{tpu_custom_call.1} parent=5 // pred_region
        %s642 = ssub.s32 %s16, 2
        // Predicated region
        $region57: #{tpu_custom_call.1} parent=55 // pred_check
          %p643 = pneg %p197
        $region58: #{tpu_custom_call.1} parent=55 // pred_check_branch
          %645 = sbr.rel (%p643) target = $region60
        $region59: #{tpu_custom_call.1} parent=55 // pred_region
          %s646 = sand.u32 %s182, 1
          %s647 = scalar_lea.sflag [#allocation3], %s646
          %s648 = sand.u32 %s182, 1
          %s649 = smul.addr %s648, 4
          %s650 = scalar_lea.vmem [#allocation2], %s649
          %651 = dma.done %s647, 64
        $region60: #{tpu_custom_call.1} parent=55 // pred_fallthru
          _
      $region56: #{tpu_custom_call.1} parent=5 // pred_fallthru
        _
    $region6: #{tpu_custom_call.1} parent=1 // loop_footer
      %s20 = sadd.s32 1, %s16
    $region7: #{tpu_custom_call.1} parent=1 // loop_footer_branch
      %15 = sbr.rel target = $region3
    $region8: #{tpu_custom_call.1} parent=1 // loop_exit
      _
    %652 = vsyncpa [#allocation3], 1
    %s653 = scalar_lea.sflag [#allocation3], 1
    %654 = vsyncpa %s653, 1

</llo_original>
